<compile_context>
chip_gen: v6e
topology: v6e:2x2x1
jax: 0.10.0
libtpu: 0.0.40
codegen_flags: <defaults>
</compile_context>

<pallas_src>
import functools
import math

import jax
import jax.numpy as jnp
from jax.experimental import pallas as pl
from jax.experimental.pallas import tpu as pltpu


_VMEM_BUDGET = 10 * 1024 * 1024   # per-step working-set target (fits v5e 16 MiB default)
_VMEM_LIMIT = 32 * 1024 * 1024    # scoped-VMEM limit, safe on v5e/v6e/v7x


# ------------------------------------------------------------------ helpers
def _apply_act(y, activation):
    if activation == "relu":
        return jnp.maximum(y, 0.0)
    if activation == "mish":
        return y * jnp.tanh(jax.nn.softplus(y))
    if activation == "sigmoid":
        return jax.nn.sigmoid(y)
    return y


def _plan_rows(M, stream_bpr, live_bpr=0, resident=0, budget=_VMEM_BUDGET):
    """Pick a row tile (multiple of 8) and padded row count under a VMEM budget."""
    tm = 128
    for cand in (1024, 512, 256, 128):
        if 2 * cand * stream_bpr + cand * live_bpr + resident <= budget:
            tm = cand
            break
    if M <= tm:
        tm = max(8, -(-M // 8) * 8)
        return tm, tm
    Mp = -(-M // tm) * tm
    return tm, Mp


def _pick_div(d, cands):
    for c in cands:
        if d >= c and d % c == 0:
            return c
    return d


def _pad_rows(x, Mp):
    M = x.shape[0]
    if Mp == M:
        return x
    return jnp.pad(x, ((0, Mp - M),) + ((0, 0),) * (x.ndim - 1))


# ------------------------------------------------------------------ fused row kernel
def _row_kernel(*refs, has_ln, has_gate, has_res, activation):
    it = iter(refs)
    x_ref = next(it)
    if has_ln:
        g_ref = next(it)
        beta_ref = next(it)
    if has_gate:
        gate_ref = next(it)
    w_ref = next(it)
    bias_ref = next(it)
    if has_res:
        res_ref = next(it)
    o_ref = next(it)

    x = x_ref[...]
    if has_ln:
        xf = x.astype(jnp.float32)
        mu = jnp.mean(xf, axis=-1, keepdims=True)
        var = jnp.mean((xf - mu) ** 2, axis=-1, keepdims=True)
        xf = (xf - mu) * jax.lax.rsqrt(var + 1e-5) * g_ref[...] + beta_ref[...]
    else:
        xf = x
    if has_gate:
        xf = xf.astype(jnp.float32) * gate_ref[...].astype(jnp.float32)
    y = jnp.dot(xf.astype(jnp.bfloat16), w_ref[...],
                preferred_element_type=jnp.float32) + bias_ref[...]
    y = _apply_act(y, activation)
    if has_res:
        y = y + res_ref[...].astype(jnp.float32)
    o_ref[...] = y.astype(o_ref.dtype)


def row_linear(x, w, b=None, *, activation=None, ln=None, gate=None, residual=None,
               out_dtype=jnp.float32):
    """(..., K) @ (K, N): weight fully VMEM-resident, optional fused LayerNorm of the
    input, elementwise gate, bias+activation epilogue and fused residual add."""
    lead = x.shape[:-1]
    K = x.shape[-1]
    N = w.shape[-1]
    M = math.prod(lead) if lead else 1
    xf = x.reshape(M, K)                          # keep incoming dtype (f32 or bf16)

    wb = w.astype(jnp.bfloat16)
    bias_arr = (jnp.zeros((1, N), jnp.float32) if b is None
                else b.reshape(1, N).astype(jnp.float32))

    stream = K * xf.dtype.itemsize + N * jnp.dtype(out_dtype).itemsize
    if gate is not None:
        stream += K * jnp.dtype(gate.dtype).itemsize
    if residual is not None:
        stream += N * residual.dtype.itemsize
    live = 4 * (K + N)
    tm, Mp = _plan_rows(M, stream, live, resident=2 * K * N + 8 * (K + N))
    xf = _pad_rows(xf, Mp)

    inputs = [xf]
    in_specs = [pl.BlockSpec((tm, K), lambda i: (i, 0))]
    if ln is not None:
        gamma, beta = ln
        inputs += [gamma.reshape(1, K).astype(jnp.float32),
                   beta.reshape(1, K).astype(jnp.float32)]
        in_specs += [pl.BlockSpec((1, K), lambda i: (0, 0)),
                     pl.BlockSpec((1, K), lambda i: (0, 0))]
    if gate is not None:
        inputs.append(_pad_rows(gate.reshape(M, K), Mp))
        in_specs.append(pl.BlockSpec((tm, K), lambda i: (i, 0)))
    inputs += [wb, bias_arr]
    in_specs += [pl.BlockSpec((K, N), lambda i: (0, 0)),      # weight resident
                 pl.BlockSpec((1, N), lambda i: (0, 0))]
    if residual is not None:
        inputs.append(_pad_rows(residual.reshape(M, N), Mp))
        in_specs.append(pl.BlockSpec((tm, N), lambda i: (i, 0)))

    kern = functools.partial(_row_kernel, has_ln=ln is not None,
                             has_gate=gate is not None,
                             has_res=residual is not None, activation=activation)
    out = pl.pallas_call(
        kern,
        out_shape=jax.ShapeDtypeStruct((Mp, N), out_dtype),
        grid=(Mp // tm,),
        in_specs=in_specs,
        out_specs=pl.BlockSpec((tm, N), lambda i: (i, 0)),
        compiler_params=pltpu.CompilerParams(
            dimension_semantics=("parallel",),
            vmem_limit_bytes=_VMEM_LIMIT),
    )(*inputs)
    return out[:M].reshape(*lead, N)


# ------------------------------------------------------------------ standalone layernorm
def _layernorm_kernel(x_ref, g_ref, b_ref, o_ref):
    x = x_ref[...].astype(jnp.float32)
    mu = jnp.mean(x, axis=-1, keepdims=True)
    var = jnp.mean((x - mu) ** 2, axis=-1, keepdims=True)
    o_ref[...] = (x - mu) * jax.lax.rsqrt(var + 1e-5) * g_ref[...] + b_ref[...]


def layer_norm(x, gamma, beta):
    lead = x.shape[:-1]
    D = x.shape[-1]
    M = math.prod(lead) if lead else 1
    xf = x.reshape(M, D).astype(jnp.float32)
    tm, Mp = _plan_rows(M, 8 * D, 4 * D)
    xf = _pad_rows(xf, Mp)
    out = pl.pallas_call(
        _layernorm_kernel,
        out_shape=jax.ShapeDtypeStruct((Mp, D), jnp.float32),
        grid=(Mp // tm,),
        in_specs=[pl.BlockSpec((tm, D), lambda i: (i, 0)),
                  pl.BlockSpec((1, D), lambda i: (0, 0)),
                  pl.BlockSpec((1, D), lambda i: (0, 0))],
        out_specs=pl.BlockSpec((tm, D), lambda i: (i, 0)),
        compiler_params=pltpu.CompilerParams(dimension_semantics=("parallel",)),
    )(xf, gamma.reshape(1, D).astype(jnp.float32), beta.reshape(1, D).astype(jnp.float32))
    return out[:M].reshape(*lead, D)


# ------------------------------------------------------------------ pairwise -> heads (transposed, lane-dense)
def _pair2heads_kernel(x_ref, g_ref, b_ref, wT_ref, o_ref):
    x = x_ref[...].astype(jnp.float32)
    mu = jnp.mean(x, axis=-1, keepdims=True)
    var = jnp.mean((x - mu) ** 2, axis=-1, keepdims=True)
    xn = ((x - mu) * jax.lax.rsqrt(var + 1e-5) * g_ref[...] + b_ref[...]).astype(jnp.bfloat16)
    # (H, P) x (tm, P) contracted over P -> (H, tm): rows are the lane (dense) axis.
    y = jax.lax.dot_general(wT_ref[...], xn, (((1,), (1,)), ((), ())),
                            preferred_element_type=jnp.float32)
    o_ref[...] = y.astype(jnp.bfloat16)


def pair2heads(x, gamma, beta, w):
    """LayerNorm(pairwise) @ w, produced transposed as (H, B, L, L) bf16 so stores are
    lane-dense and no (B,L,L,H)->(B,H,L,L) relayout is needed."""
    B, L, _, P = x.shape
    H = w.shape[-1]
    M = B * L * L
    xf = x.reshape(M, P).astype(jnp.float32)
    tm, Mp = _plan_rows(M, 4 * P + 2 * H, 4 * P)
    xf = _pad_rows(xf, Mp)
    wT = jnp.transpose(w).astype(jnp.bfloat16)             # (H, P)
    out = pl.pallas_call(
        _pair2heads_kernel,
        out_shape=jax.ShapeDtypeStruct((H, Mp), jnp.bfloat16),
        grid=(Mp // tm,),
        in_specs=[pl.BlockSpec((tm, P), lambda i: (i, 0)),
                  pl.BlockSpec((1, P), lambda i: (0, 0)),
                  pl.BlockSpec((1, P), lambda i: (0, 0)),
                  pl.BlockSpec((H, P), lambda i: (0, 0))],
        out_specs=pl.BlockSpec((H, tm), lambda i: (0, i)),
        compiler_params=pltpu.CompilerParams(
            dimension_semantics=("parallel",),
            vmem_limit_bytes=_VMEM_LIMIT),
    )(xf, gamma.reshape(1, P).astype(jnp.float32),
      beta.reshape(1, P).astype(jnp.float32), wT)
    return out[:, :M].reshape(H, B, L, L)


# ------------------------------------------------------------------ triangle projection (+gating) kernel
def _tri_proj_kernel(x_ref, g_ref, b_ref, m_ref, w_ref, bias_ref, l_ref, r_ref, og_ref):
    x = x_ref[...].astype(jnp.float32)
    mu = jnp.mean(x, axis=-1, keepdims=True)
    var = jnp.mean((x - mu) ** 2, axis=-1, keepdims=True)
    xn = ((x - mu) * jax.lax.rsqrt(var + 1e-5) * g_ref[...] + b_ref[...]).astype(jnp.bfloat16)

    def proj(i):
        return jnp.dot(xn, w_ref[i], preferred_element_type=jnp.float32) + bias_ref[i]

    pm = m_ref[...]                                         # (tm, 1) pair mask
    left = proj(0) * pm
    right = proj(1) * pm
    l_ref[...] = (left * jax.nn.sigmoid(proj(2))).astype(jnp.bfloat16)
    r_ref[...] = (right * jax.nn.sigmoid(proj(3))).astype(jnp.bfloat16)
    og_ref[...] = jax.nn.sigmoid(proj(4)).astype(jnp.bfloat16)


def tri_project(x, pair_mask, prm):
    """LayerNorm(x) -> {left,right,3 gates} with masking + sigmoid gating fused in the
    epilogue; emits left*sig(lg)*mask, right*sig(rg)*mask, sig(og) directly in bf16."""
    B, L, _, P = x.shape
    M = B * L * L
    xf = x.reshape(M, P).astype(jnp.float32)
    mk = pair_mask.reshape(M, 1).astype(jnp.float32)
    w5 = jnp.stack([prm["left_w"], prm["right_w"], prm["lgate_w"],
                    prm["rgate_w"], prm["ogate_w"]], axis=0).astype(jnp.bfloat16)   # (5,P,P)
    b5 = jnp.stack([prm["left_b"], prm["right_b"], prm["lgate_b"],
                    prm["rgate_b"], prm["ogate_b"]], axis=0).reshape(5, 1, P).astype(jnp.float32)

    stream = 4 * P + 4 + 3 * 2 * P
    tm, Mp = _plan_rows(M, stream, 6 * 4 * P, resident=5 * P * P * 2)
    xf = _pad_rows(xf, Mp)
    mk = _pad_rows(mk, Mp)

    outs = pl.pallas_call(
        _tri_proj_kernel,
        out_shape=tuple(jax.ShapeDtypeStruct((Mp, P), jnp.bfloat16) for _ in range(3)),
        grid=(Mp // tm,),
        in_specs=[pl.BlockSpec((tm, P), lambda i: (i, 0)),
                  pl.BlockSpec((1, P), lambda i: (0, 0)),
                  pl.BlockSpec((1, P), lambda i: (0, 0)),
                  pl.BlockSpec((tm, 1), lambda i: (i, 0)),
                  pl.BlockSpec((5, P, P), lambda i: (0, 0, 0)),
                  pl.BlockSpec((5, 1, P), lambda i: (0, 0, 0))],
        out_specs=tuple(pl.BlockSpec((tm, P), lambda i: (i, 0)) for _ in range(3)),
        compiler_params=pltpu.CompilerParams(
            dimension_semantics=("parallel",),
            vmem_limit_bytes=_VMEM_LIMIT),
    )(xf, prm["norm_g"].reshape(1, P).astype(jnp.float32),
      prm["norm_b"].reshape(1, P).astype(jnp.float32), mk, w5, b5)
    left, right, og = (o[:M].reshape(B, L, L, P) for o in outs)
    return left, right, og


# ------------------------------------------------------------------ attention kernel (query-tiled)
def _attention_kernel(q_ref, k_ref, v_ref, bias_ref, mask_ref, o_ref, p_ref, *, scale):
    q = q_ref[...]                                     # (tq, dk) bf16
    k = k_ref[...]                                     # (L, dk) bf16
    s = jax.lax.dot_general(q, k, (((1,), (1,)), ((), ())),
                            preferred_element_type=jnp.float32) * scale
    s = s + bias_ref[...].astype(jnp.float32)          # pairwise bias (tq, L), bf16 stream
    s = s + jnp.where(mask_ref[...] > 0, 0.0, -1e9)    # key padding mask (1, L)
    m = jnp.max(s, axis=-1, keepdims=True)
    e = jnp.exp(s - m)
    probs = e * (1.0 / jnp.sum(e, axis=-1, keepdims=True))   # exact reciprocal
    p_ref[...] = probs.astype(jnp.bfloat16)
    o_ref[...] = jnp.dot(probs.astype(jnp.bfloat16), v_ref[...],
                         preferred_element_type=jnp.float32).astype(o_ref.dtype)


def pallas_attention(q, k, v, bias_hb, mask):
    """q,k,v: (B,H,L,dk) bf16; bias_hb: (H,B,L,L) bf16; mask: (B,L).
    Query-tiled: per grid step only a (tq, L) score tile is live; K/V stay full-L."""
    B, H, L, dk = q.shape
    scale = 1.0 / (dk ** 0.5)
    tq = next((t for t in (128, 64, 32, 16, 8) if L % t == 0), L)
    mask3 = mask.reshape(B, 1, L).astype(jnp.float32)
    kern = functools.partial(_attention_kernel, scale=scale)
    out, attn = pl.pallas_call(
        kern,
        out_shape=(jax.ShapeDtypeStruct((B, H, L, dk), jnp.bfloat16),
                   jax.ShapeDtypeStruct((B, H, L, L), jnp.bfloat16)),
        grid=(B, H, L // tq),
        in_specs=[
            pl.BlockSpec((None, None, tq, dk), lambda b, h, qi: (b, h, qi, 0)),
            pl.BlockSpec((None, None, L, dk), lambda b, h, qi: (b, h, 0, 0)),
            pl.BlockSpec((None, None, L, dk), lambda b, h, qi: (b, h, 0, 0)),
            pl.BlockSpec((None, None, tq, L), lambda b, h, qi: (h, b, qi, 0)),
            pl.BlockSpec((None, 1, L), lambda b, h, qi: (b, 0, 0)),
        ],
        out_specs=(
            pl.BlockSpec((None, None, tq, dk), lambda b, h, qi: (b, h, qi, 0)),
            pl.BlockSpec((None, None, tq, L), lambda b, h, qi: (b, h, qi, 0)),
        ),
        compiler_params=pltpu.CompilerParams(
            dimension_semantics=("parallel", "parallel", "parallel"),
            vmem_limit_bytes=_VMEM_LIMIT),
    )(q, k, v, bias_hb, mask3)
    return out, attn


# ------------------------------------------------------------------ batched matmul kernel (tiled)
def _bmm_kernel(*refs, has_bias, has_res):
    it = iter(refs)
    a_ref = next(it)
    b_ref = next(it)
    bias_ref = next(it) if has_bias else None
    res_ref = next(it) if has_res else None
    o_ref = next(it)
    y = jax.lax.dot_general(a_ref[...], b_ref[...],
                            dimension_numbers=(((2,), (1,)), ((0,), (0,))),
                            preferred_element_type=jnp.float32)
    if has_bias:
        y = y + bias_ref[...]
    if has_res:
        y = y + res_ref[...].astype(jnp.float32)
    o_ref[...] = y.astype(o_ref.dtype)


def pallas_bmm(a, b, bias=None, residual=None, out_dtype=jnp.float32):
    """a: (N, M, K), b: (N, K, P) -> (N, M, P); M/P tiled and batch-blocked under a VMEM
    budget, with optional fused bias (over P) and residual add in the epilogue."""
    a = a.astype(jnp.bfloat16)
    b = b.astype(jnp.bfloat16)
    N, M, K = a.shape
    P = b.shape[-1]
    ob = jnp.dtype(out_dtype).itemsize
    rb = residual.dtype.itemsize if residual is not None else 0
    tm = _pick_div(M, (256, 128))
    tp = _pick_div(P, (512, 256, 128))

    def footprint(bc_, tm_, tp_):
        return 2 * bc_ * (tm_ * K * 2 + K * tp_ * 2 + tm_ * tp_ * (ob + rb))

    while footprint(1, tm, tp) > _VMEM_BUDGET and tp > 128 and P % (tp // 2) == 0:
        tp //= 2
    while footprint(1, tm, tp) > _VMEM_BUDGET and tm > 128 and M % (tm // 2) == 0:
        tm //= 2
    bc = 1
    for c in (8, 4, 2, 1):
        if N % c == 0 and footprint(c, tm, tp) <= _VMEM_BUDGET:
            bc = c
            break

    inputs = [a, b]
    in_specs = [pl.BlockSpec((bc, tm, K), lambda n, i, j: (n, i, 0)),
                pl.BlockSpec((bc, K, tp), lambda n, i, j: (n, 0, j))]
    if bias is not None:
        inputs.append(bias.reshape(1, 1, P).astype(jnp.float32))
        in_specs.append(pl.BlockSpec((1, 1, tp), lambda n, i, j: (0, 0, j)))
    if residual is not None:
        inputs.append(residual)
        in_specs.append(pl.BlockSpec((bc, tm, tp), lambda n, i, j: (n, i, j)))

    kern = functools.partial(_bmm_kernel, has_bias=bias is not None,
                             has_res=residual is not None)
    return pl.pallas_call(
        kern,
        out_shape=jax.ShapeDtypeStruct((N, M, P), out_dtype),
        grid=(N // bc, M // tm, P // tp),
        in_specs=in_specs,
        out_specs=pl.BlockSpec((bc, tm, tp), lambda n, i, j: (n, i, j)),
        compiler_params=pltpu.CompilerParams(
            dimension_semantics=("parallel", "parallel", "parallel"),
            vmem_limit_bytes=_VMEM_LIMIT),
    )(*inputs)


# ------------------------------------------------------------------ module pieces
def conv1d_mish_residual(x, w, b, k):
    """Conv1d (padding=k//2) over length, channel-last: bf16 im2col + one fused matmul
    with Mish activation and the residual add in the epilogue."""
    B, L, C = x.shape
    pad = k // 2
    xp = jnp.pad(x.astype(jnp.bfloat16), ((0, 0), (pad, pad), (0, 0)))
    patches = jnp.concatenate([xp[:, t:t + L, :] for t in range(k)], axis=-1)  # (B,L,k*C) bf16
    # TODO(synk): replace im2col with a k-tap shifted-row accumulation grid axis.
    w2 = jnp.transpose(w, (2, 1, 0)).reshape(k * C, -1)                        # (k*C_in, C_out)
    return row_linear(patches, w2, b, activation="mish", residual=x)


def multi_head_attention(x, p, bias_hb, mask):
    """Returns (mish(output-projection) + residual, attention weights)."""
    B, L, D = x.shape
    H = p["n_heads"]
    dk = D // H
    w_qkv = jnp.concatenate([p["w_q"], p["w_k"], p["w_v"]], axis=1)    # (D, 3D)
    b_qkv = jnp.concatenate([p["b_q"], p["b_k"], p["b_v"]], axis=0)
    qkv = row_linear(x, w_qkv, b_qkv, out_dtype=jnp.bfloat16)          # (B, L, 3D) bf16
    q, k, v = jnp.split(qkv, 3, axis=-1)
    q = q.reshape(B, L, H, dk).transpose(0, 2, 1, 3)
    k = k.reshape(B, L, H, dk).transpose(0, 2, 1, 3)
    v = v.reshape(B, L, H, dk).transpose(0, 2, 1, 3)
    ctx, attn = pallas_attention(q, k, v, bias_hb, mask)
    ctx = ctx.transpose(0, 2, 1, 3).reshape(B, L, D)
    out = row_linear(ctx, p["w_o"], p["b_o"], activation="mish", residual=x)
    return out, attn


def outer_product_mean(seq, pairwise, p):
    """pairwise + OuterProductMean(seq); the (B,L,L,m,m) intermediate is never built and
    the b2 bias + pairwise residual are fused into the bmm epilogue."""
    a = row_linear(seq, p["opm_w1"], p["opm_b1"], out_dtype=jnp.bfloat16)    # (B, L, m)
    B, L, m = a.shape
    P = p["opm_w2"].shape[-1]
    W2 = p["opm_w2"].reshape(m, m, P)                                        # [m1, m2, p]
    W2t = jnp.transpose(W2, (1, 0, 2)).reshape(m, m * P)                     # [m2, (m1,p)]
    C = row_linear(a.reshape(B * L, m), W2t,
                   out_dtype=jnp.bfloat16).reshape(B, L, m, P)               # C[b,j,m1,p]
    Cr = jnp.transpose(C, (0, 2, 1, 3)).reshape(B, m, L * P)                 # [b, m1, (j,p)]
    bias = jnp.tile(p["opm_b2"], L)                                          # (L*P,)
    res = pairwise.reshape(B, L, L * P)
    out = pallas_bmm(a, Cr, bias=bias, residual=res)                         # (B, L, L*P) f32
    return out.reshape(B, L, L, P)


def triangle_multiplicative(x, prm, pair_mask, mix):
    """x + TriangleMultiplicativeModule(x): gating/masking fused into the projection
    epilogue (bf16), tiled L x L batched matmul, and LN*gate + to_out + residual fused."""
    B, L, _, P = x.shape
    left, right, og = tri_project(x, pair_mask, prm)                 # (B,L,L,P) bf16 each
    if mix == "outgoing":
        # out[b,i,j,d] = sum_k left[b,i,k,d] * right[b,j,k,d]
        A = jnp.transpose(left, (0, 3, 1, 2)).reshape(B * P, L, L)
        Bm = jnp.transpose(right, (0, 3, 2, 1)).reshape(B * P, L, L)
    else:
        # ingoing: out[b,i,j,d] = sum_k left[b,k,j,d] * right[b,k,i,d]
        A = jnp.transpose(right, (0, 3, 2, 1)).reshape(B * P, L, L)
        Bm = jnp.transpose(left, (0, 3, 1, 2)).reshape(B * P, L, L)
    prod = pallas_bmm(A, Bm, out_dtype=jnp.bfloat16)
    prod = prod.reshape(B, P, L, L).transpose(0, 2, 3, 1)             # (B,L,L,P) bf16
    return row_linear(prod, prm["to_out_w"], prm["to_out_b"],
                      ln=(prm["out_norm_g"], prm["out_norm_b"]),
                      gate=og, residual=x)


# ------------------------------------------------------------------ full forward
def conv_transformer_encoder(sequence_features, pairwise_features, sequence_mask, p):
    B, L, D = sequence_features.shape
    mask = (sequence_mask.astype(jnp.float32) if sequence_mask is not None
            else jnp.ones((B, L), jnp.float32))

    src = sequence_features * mask[..., None]

    # conv branch (mish + residual fused; dropout2 = identity)
    src = conv1d_mish_residual(src, p["conv_w"], p["conv_b"], p["k"])
    src = layer_norm(src, p["norm3_g"], p["norm3_b"])

    # pairwise bias -> heads (LN fused; transposed lane-dense bf16 output, no relayout)
    pairwise_bias = pair2heads(pairwise_features, p["pairnorm_g"], p["pairnorm_b"],
                               p["pair2heads_w"])                     # (H, B, L, L) bf16

    # self-attention (query-tiled; mask in-kernel; mish + residual fused; dropout1 = identity)
    res_src, attn_w = multi_head_attention(src, p, pairwise_bias, mask)
    src = layer_norm(res_src, p["norm1_g"], p["norm1_b"])

    # sequence transition (ReLU fused; bf16 hidden; residual fused)
    h = row_linear(src, p["seq_ffn_w1"], p["seq_ffn_b1"], activation="relu",
                   out_dtype=jnp.bfloat16)
    src = row_linear(h, p["seq_ffn_w2"], p["seq_ffn_b2"], activation="relu", residual=src)
    src = layer_norm(src, p["norm2_g"], p["norm2_b"])

    # pairwise stack
    # TODO(synk): OuterProductMean follows the unmasked reference; sequence_mask not applied there.
    sq = outer_product_mean(src, pairwise_features, p)
    pair_mask = mask[:, :, None] * mask[:, None, :]                   # (B, L, L)
    sq = triangle_multiplicative(sq, p["tri_out"], pair_mask, "outgoing")
    sq = triangle_multiplicative(sq, p["tri_in"], pair_mask, "ingoing")

    # pair transition (LN fused into first linear; bf16 hidden; ReLU + residual fused)
    t = row_linear(sq, p["pair_ffn_w1"], p["pair_ffn_b1"], activation="relu",
                   ln=(p["pair_ffn_norm_g"], p["pair_ffn_norm_b"]),
                   out_dtype=jnp.bfloat16)
    sq = row_linear(t, p["pair_ffn_w2"], p["pair_ffn_b2"], activation="relu", residual=sq)

    return src, sq, attn_w


# ------------------------------------------------------------------ deterministic params
def init_params(key, D, H, P, m, k):
    keys = iter(jax.random.split(key, 64))

    def w(shape, scale=0.05):
        return jax.random.normal(next(keys), shape, jnp.float32) * scale

    def tri_params():
        return {
            "norm_g": jnp.ones((P,), jnp.float32), "norm_b": jnp.zeros((P,), jnp.float32),
            "left_w": w((P, P)), "left_b": jnp.zeros((P,), jnp.float32),
            "right_w": w((P, P)), "right_b": jnp.zeros((P,), jnp.float32),
            # gates initialized weight=0 / bias=1 (lucidrains-style deterministic init)
            "lgate_w": jnp.zeros((P, P), jnp.float32), "lgate_b": jnp.ones((P,), jnp.float32),
            "rgate_w": jnp.zeros((P, P), jnp.float32), "rgate_b": jnp.ones((P,), jnp.float32),
            "ogate_w": jnp.zeros((P, P), jnp.float32), "ogate_b": jnp.ones((P,), jnp.float32),
            "out_norm_g": jnp.ones((P,), jnp.float32), "out_norm_b": jnp.zeros((P,), jnp.float32),
            "to_out_w": w((P, P)), "to_out_b": jnp.zeros((P,), jnp.float32),
        }

    params = {
        "k": k, "n_heads": H,
        "conv_w": w((D, D, k)), "conv_b": jnp.zeros((D,), jnp.float32),
        "w_q": w((D, D)), "b_q": jnp.zeros((D,), jnp.float32),
        "w_k": w((D, D)), "b_k": jnp.zeros((D,), jnp.float32),
        "w_v": w((D, D)), "b_v": jnp.zeros((D,), jnp.float32),
        "w_o": w((D, D)), "b_o": jnp.zeros((D,), jnp.float32),
        "norm1_g": jnp.ones((D,), jnp.float32), "norm1_b": jnp.zeros((D,), jnp.float32),
        "norm2_g": jnp.ones((D,), jnp.float32), "norm2_b": jnp.zeros((D,), jnp.float32),
        "norm3_g": jnp.ones((D,), jnp.float32), "norm3_b": jnp.zeros((D,), jnp.float32),
        "pair2heads_w": w((P, H)),
        "pairnorm_g": jnp.ones((P,), jnp.float32), "pairnorm_b": jnp.zeros((P,), jnp.float32),
        "opm_w1": w((D, m)), "opm_b1": jnp.zeros((m,), jnp.float32),
        "opm_w2": w((m * m, P)), "opm_b2": jnp.zeros((P,), jnp.float32),
        "tri_out": tri_params(),
        "tri_in": tri_params(),
        "pair_ffn_norm_g": jnp.ones((P,), jnp.float32), "pair_ffn_norm_b": jnp.zeros((P,), jnp.float32),
        "pair_ffn_w1": w((P, 4 * P)), "pair_ffn_b1": jnp.zeros((4 * P,), jnp.float32),
        "pair_ffn_w2": w((4 * P, P)), "pair_ffn_b2": jnp.zeros((P,), jnp.float32),
        "seq_ffn_w1": w((D, 4 * D)), "seq_ffn_b1": jnp.zeros((4 * D,), jnp.float32),
        "seq_ffn_w2": w((4 * D, D)), "seq_ffn_b2": jnp.zeros((D,), jnp.float32),
    }
    return params


# ------------------------------------------------------------------ main
if __name__ == "__main__":
    B, L, D, H, P, m, k = 2, 16, 32, 4, 32, 8, 3
    key = jax.random.PRNGKey(0)
    k_seq, k_pair, k_par = jax.random.split(key, 3)

    sequence_features = jax.random.normal(k_seq, (B, L, D), jnp.float32)
    pairwise_features = jax.random.normal(k_pair, (B, L, L, P), jnp.float32)
    sequence_mask = jnp.ones((B, L), jnp.float32).at[:, -2:].set(0.0)

    params = init_params(k_par, D, H, P, m, k)

    seq_out, pair_out, attn_w = conv_transformer_encoder(
        sequence_features, pairwise_features, sequence_mask, params)

    jax.block_until_ready((seq_out, pair_out, attn_w))
    assert seq_out.shape == (B, L, D)
    assert pair_out.shape == (B, L, L, P)
    assert attn_w.shape == (B, H, L, L)
    print("KERNEL_OK")
</pallas_src>

<mosaic_0001>
module attributes {stable_mosaic.version = 11 : i64} {
  func.func @_row_kernel(%arg0: i32, %arg1: memref<32x96xbf16, #tpu.memory_space<vmem>>, %arg2: memref<96x32xbf16, #tpu.memory_space<vmem>>, %arg3: memref<1x32xf32, #tpu.memory_space<vmem>>, %arg4: memref<32x32xf32, #tpu.memory_space<vmem>>, %arg5: memref<32x32xf32, #tpu.memory_space<vmem>>) attributes {dimension_semantics = [#tpu.dimension_semantics<parallel>], iteration_bounds = array<i64: 1>, scalar_prefetch = 0 : i64, scratch_operands = 0 : i64, tpu.core_type = #tpu.core_type<tc>, window_params = [{transform_indices = @transform_0, window_bounds = array<i64: 32, 96>}, {pipeline_mode = #tpu.pipeline_mode<synchronous>, transform_indices = @transform_1, window_bounds = array<i64: 96, 32>}, {pipeline_mode = #tpu.pipeline_mode<synchronous>, transform_indices = @transform_2, window_bounds = array<i64: 1, 32>}, {transform_indices = @transform_3, window_bounds = array<i64: 32, 32>}, {transform_indices = @transform_4, window_bounds = array<i64: 32, 32>}]} {
    %c0 = arith.constant 0 : index
    %c0_0 = arith.constant 0 : index
    %0 = vector.load %arg1[%c0, %c0_0] : memref<32x96xbf16, #tpu.memory_space<vmem>>, vector<32x96xbf16>
    %c0_1 = arith.constant 0 : index
    %c0_2 = arith.constant 0 : index
    %1 = vector.load %arg2[%c0_1, %c0_2] : memref<96x32xbf16, #tpu.memory_space<vmem>>, vector<96x32xbf16>
    %cst = arith.constant dense<0.000000e+00> : vector<32x32xf32>
    %2 = tpu.matmul %0, %1, %cst {dimension_numbers = #tpu.dot_dimension_numbers<[1], [0], [0], [1], [0, 0, 1, 1], [], []>} : vector<32x96xbf16>, vector<96x32xbf16>, vector<32x32xf32> -> vector<32x32xf32>
    %c0_3 = arith.constant 0 : index
    %c0_4 = arith.constant 0 : index
    %3 = vector.load %arg3[%c0_3, %c0_4] : memref<1x32xf32, #tpu.memory_space<vmem>>, vector<1x32xf32>
    %4 = vector.broadcast %3 : vector<1x32xf32> to vector<32x32xf32>
    %5 = arith.addf %2, %4 : vector<32x32xf32>
    %cst_5 = arith.constant 0.000000e+00 : f32
    %6 = vector.broadcast %cst_5 : f32 to vector<32x32xf32>
    %7 = arith.maximumf %5, %6 : vector<32x32xf32>
    %8 = vector.broadcast %cst_5 : f32 to vector<32x32xf32>
    %9 = arith.subf %5, %8 : vector<32x32xf32>
    %10 = arith.cmpf one, %9, %9 : vector<32x32xf32>
    %11 = vector.broadcast %cst_5 : f32 to vector<32x32xf32>
    %12 = arith.addf %5, %11 : vector<32x32xf32>
    %13 = math.absf %9 : vector<32x32xf32>
    %cst_6 = arith.constant 0.000000e+00 : f32
    %14 = vector.broadcast %cst_6 : f32 to vector<32x32xf32>
    %15 = arith.subf %14, %13 : vector<32x32xf32>
    %16 = math.exp %15 : vector<32x32xf32>
    %17 = math.log1p %16 : vector<32x32xf32>
    %18 = arith.addf %7, %17 : vector<32x32xf32>
    %19 = arith.select %10, %12, %18 : vector<32x32xi1>, vector<32x32xf32>
    %20 = math.tanh %19 : vector<32x32xf32>
    %21 = arith.mulf %5, %20 : vector<32x32xf32>
    %c0_7 = arith.constant 0 : index
    %c0_8 = arith.constant 0 : index
    %22 = vector.load %arg4[%c0_7, %c0_8] : memref<32x32xf32, #tpu.memory_space<vmem>>, vector<32x32xf32>
    %23 = arith.addf %21, %22 : vector<32x32xf32>
    %c0_9 = arith.constant 0 : index
    %c0_10 = arith.constant 0 : index
    %24 = vector.load %arg5[%c0_9, %c0_10] : memref<32x32xf32, #tpu.memory_space<vmem>>, vector<32x32xf32>
    tpu.vector_store %arg5[%c0_9, %c0_10], %23 {strides = array<i32>} : memref<32x32xf32, #tpu.memory_space<vmem>>, vector<32x32xf32>,
    return
  }
  func.func @transform_0(%arg0: i32) -> (i32, i32) {
    %c0_i32 = arith.constant 0 : i32
    %c0_i32_0 = arith.constant 0 : i32
    return %arg0, %c0_i32 : i32, i32
  }
  func.func @transform_1(%arg0: i32) -> (i32, i32) {
    %c0_i32 = arith.constant 0 : i32
    %c0_i32_0 = arith.constant 0 : i32
    %c0_i32_1 = arith.constant 0 : i32
    return %c0_i32, %c0_i32_0 : i32, i32
  }
  func.func @transform_2(%arg0: i32) -> (i32, i32) {
    %c0_i32 = arith.constant 0 : i32
    %c0_i32_0 = arith.constant 0 : i32
    %c0_i32_1 = arith.constant 0 : i32
    return %c0_i32, %c0_i32_0 : i32, i32
  }
  func.func @transform_3(%arg0: i32) -> (i32, i32) {
    %c0_i32 = arith.constant 0 : i32
    %c0_i32_0 = arith.constant 0 : i32
    return %arg0, %c0_i32 : i32, i32
  }
  func.func @transform_4(%arg0: i32) -> (i32, i32) {
    %c0_i32 = arith.constant 0 : i32
    %c0_i32_0 = arith.constant 0 : i32
    return %arg0, %c0_i32 : i32, i32
  }
}

</mosaic_0001>

<llo_original>
// kernel: tpu_custom_call.1
$region0: #{tpu_custom_call.1}
  #allocation0 [shape = 'u32[]', space=smem, size = 0x4, offset = 0x4, fixed_abs, tag = 'smem constant byte address 0x4 - core index']
  #allocation1 [shape = 'u32[144,128]{1,0:T(1,128)}', space=vmem, size = 0x12000, scoped, tag = 'internal scratch']
  %s0 = inlined_call_operand.vmem [shape: bf16[32,96], index: 0, kind: input, shape index: {}]
  %s1 = inlined_call_operand.vmem [shape: bf16[96,32], index: 1, kind: input, shape index: {}]
  %s2 = inlined_call_operand.vmem [shape: f32[1,32], index: 2, kind: input, shape index: {}]
  %s3 = inlined_call_operand.vmem [shape: f32[32,32], index: 3, kind: input, shape index: {}]
  %s4 = inlined_call_operand.hbm [shape: f32[32,32], index: 4, kind: output, shape index: {}]
  %s5 = sld [smem:[#allocation0]]
  $region26: #{tpu_custom_call.1} parent=0
    _
  %s7 = ssub.s32 1, %s5
  %s8 = scalar_select 0, %s7, %s5
  $region1: #{tpu_custom_call.1} parent=0
    #allocation2 [shape = 'u8[16384]{0}', space=vmem, size = 0x4000, scoped, tag = 'output window, operand 0, single buffered']
    #allocation3 [shape = 's32[1]{0}', space=sflag, size = 0x4, scoped, tag = 'scoped memory for tpu_custom_call.1']
    %9 = vsyncpa [#allocation3], 0
    // Predicated region
    $region2: #{tpu_custom_call.1} parent=1 // pred_check
      _
    $region3: #{tpu_custom_call.1} parent=1 // pred_check_branch
      %11 = sbr.rel (0) target = $region5
    $region4: #{tpu_custom_call.1} parent=1 // pred_region
      _
    $region5: #{tpu_custom_call.1} parent=1 // pred_fallthru
      _
    // Predicated region
    $region6: #{tpu_custom_call.1} parent=1 // pred_check
      _
    $region7: #{tpu_custom_call.1} parent=1 // pred_check_branch
      %13 = sbr.rel (0) target = $region9
    $region8: #{tpu_custom_call.1} parent=1 // pred_region
      _
    $region9: #{tpu_custom_call.1} parent=1 // pred_fallthru
      _
    // Predicated region
    $region10: #{tpu_custom_call.1} parent=1 // pred_check
      _
    $region11: #{tpu_custom_call.1} parent=1 // pred_check_branch
      %15 = sbr.rel (0) target = $region13
    $region12: #{tpu_custom_call.1} parent=1 // pred_region
      _
    $region13: #{tpu_custom_call.1} parent=1 // pred_fallthru
      _
    // Predicated region
    $region14: #{tpu_custom_call.1} parent=1 // pred_check
      _
    $region15: #{tpu_custom_call.1} parent=1 // pred_check_branch
      %17 = sbr.rel (0) target = $region17
    $region16: #{tpu_custom_call.1} parent=1 // pred_region
      _
    $region17: #{tpu_custom_call.1} parent=1 // pred_fallthru
      _
    %v19 = vld [vmem:[%s0] sm:$0xf]
    %v20 = vld [vmem:[%s0 + $0x4] sm:$0xf]
    %v21 = vld [vmem:[%s0 + $0x8] sm:$0xf]
    %v22 = vld [vmem:[%s0 + $0xc] sm:$0xf]
    %v23 = vld [vmem:[%s1] sm:$0xf]
    %v24 = vld [vmem:[%s1 + $0x4] sm:$0xf]
    %v25 = vld [vmem:[%s1 + $0x8] sm:$0xf]
    %v26 = vld [vmem:[%s1 + $0xc] sm:$0xf]
    %v27 = vld [vmem:[%s1 + $0x10] sm:$0xf]
    %v28 = vld [vmem:[%s1 + $0x14] sm:$0xf]
    %v29 = vld [vmem:[%s1 + $0x18] sm:$0xf]
    %v30 = vld [vmem:[%s1 + $0x1c] sm:$0xf]
    %v31 = vld [vmem:[%s1 + $0x20] sm:$0xf]
    %v32 = vld [vmem:[%s1 + $0x24] sm:$0xf]
    %v33 = vld [vmem:[%s1 + $0x28] sm:$0xf]
    %v34 = vld [vmem:[%s1 + $0x2c] sm:$0xf]
    %v35 = vld [vmem:[%s2] sm:$0x1]
    %v37 = vlaneseq
    %v38 = vshrl.u32 %v37, 7
    %v39 = vsub.s32 0, %v38
    %v40 = vrot.slane %v35, %v39
    %v46 = vunpack.c.l.b16 %v19
    %v47 = vunpack.c.l.b16 %v20
    %v48 = vunpack.c.l.b16 %v21
    %v49 = vunpack.c.l.b16 %v22
    %v50 = vpack.c.b16 %v47, %v46
    %v51 = vpack.c.b16 %v49, %v48
    %v64 = vunpack.c.l.b16 %v23
    %v65 = vunpack.c.l.b16 %v24
    %v66 = vunpack.c.l.b16 %v25
    %v67 = vunpack.c.l.b16 %v26
    %v68 = vunpack.c.l.b16 %v27
    %v69 = vunpack.c.l.b16 %v28
    %v70 = vunpack.c.l.b16 %v29
    %v71 = vunpack.c.l.b16 %v30
    %v72 = vunpack.c.l.b16 %v31
    %v73 = vunpack.c.l.b16 %v32
    %v74 = vunpack.c.l.b16 %v33
    %v75 = vunpack.c.l.b16 %v34
    %v76 = vpack.c.b16 %v65, %v64
    %v77 = vpack.c.b16 %v67, %v66
    %v78 = vpack.c.b16 %v69, %v68
    %v79 = vpack.c.b16 %v71, %v70
    %v80 = vpack.c.b16 %v73, %v72
    %v81 = vpack.c.b16 %v75, %v74
    %vm88 = vcmask 785408
    %v90 = vsel %vm88, %v50, 0
    %v93 = vsel %vm88, %v51, 0
    %95 = vmatprep.subr.bf16.mxu0 0
    %96 = vmatpush1.bf16.msra.mxu0 0
    %97 = vmatprep.subr.bf16.mxu0 0
    %98 = vmatpush1.bf16.msra.mxu0 0
    %99 = vmatprep.subr.bf16.mxu0 0
    %100 = vmatpush1.bf16.msra.mxu0 %v81
    %101 = vmatprep.subr.bf16.mxu0 0
    %102 = vmatpush1.bf16.msra.mxu0 %v80
    %103 = vmatprep.subr.bf16.mxu0 0
    %104 = vmatpush1.bf16.msra.mxu0 %v79
    %105 = vmatprep.subr.bf16.mxu0 0
    %106 = vmatpush1.bf16.msra.mxu0 %v78
    %107 = vmatprep.subr.bf16.mxu0 0
    %108 = vmatpush1.bf16.msra.mxu0 %v77
    %109 = vmatprep.subr.bf16.mxu0 0
    %110 = vmatpush1.bf16.msra.mxu0 %v76
    %111 = vmatprep.subr.bf16.mxu0 0
    %112 = vmatpush2.bf16.msra.mxu0 0
    %113 = vmatprep.subr.bf16.mxu0 0
    %114 = vmatpush2.bf16.msra.mxu0 0
    %115 = vmatprep.subr.bf16.mxu0 0
    %116 = vmatpush2.bf16.msra.mxu0 0
    %117 = vmatprep.subr.bf16.mxu0 0
    %118 = vmatpush2.bf16.msra.mxu0 0
    %119 = vmatprep.subr.bf16.mxu0 0
    %120 = vmatpush2.bf16.msra.mxu0 0
    %121 = vmatprep.subr.bf16.mxu0 0
    %122 = vmatpush2.bf16.msra.mxu0 0
    %123 = vmatprep.subr.bf16.mxu0 0
    %124 = vmatpush2.bf16.msra.mxu0 0
    %125 = vmatprep.subr.bf16.mxu0 0
    %126 = vmatpush2.bf16.msra.mxu0 0
    %127 = vmatprep.mubr.bf16.mxu0 0
    %128 = vmatmul.mubr.bf16.gmra.mxu0 %v90
    %v129 = vpop.f32.mrf.mxu0
    %v130 = vadd.f32 %v40, %v129
    %v131 = vpop.f32.mrf.mxu0
    %v132 = vpop.f32.mrf.mxu0
    %v133 = vadd.f32 %v40, %v132
    %v134 = vpop.f32.mrf.mxu0
    %135 = vmatprep.mubr.bf16.mxu0 0
    %136 = vmatmul.mubr.bf16.gmra.mxu0 %v93
    %v137 = vpop.f32.mrf.mxu0
    %v138 = vadd.f32 %v40, %v137
    %v139 = vpop.f32.mrf.mxu0
    %v140 = vpop.f32.mrf.mxu0
    %v141 = vadd.f32 %v40, %v140
    %v142 = vpop.f32.mrf.mxu0
    %143 = vdwg.mxu0
    %v144 = vmax.f32 %v130, 0.0
    %v145 = vmax.f32 %v133, 0.0
    %v146 = vmax.f32 %v138, 0.0
    %v147 = vmax.f32 %v141, 0.0
    %vm148 = vcmp.ne.f32.partialorder %v130, %v130
    %vm149 = vcmp.ne.f32.partialorder %v133, %v133
    %vm150 = vcmp.ne.f32.partialorder %v138, %v138
    %vm151 = vcmp.ne.f32.partialorder %v141, %v141
    %v152 = vadd.f32 %v130, 0.0
    %v153 = vadd.f32 %v133, 0.0
    %v154 = vadd.f32 %v138, 0.0
    %v155 = vadd.f32 %v141, 0.0
    %v156 = vand.u32 2147483647, %v130
    %v157 = vand.u32 2147483647, %v133
    %v158 = vand.u32 2147483647, %v138
    %v159 = vand.u32 2147483647, %v141
    %v160 = vsub.f32 0.0, %v156
    %v161 = vsub.f32 0.0, %v157
    %v162 = vsub.f32 0.0, %v158
    %v163 = vsub.f32 0.0, %v159
    %v164 = vmul.f32 %v160, 1.442695
    %v165 = vpow.pop %v164
    %v166 = vmul.f32 %v161, 1.442695
    %v167 = vpow.pop %v166
    %v168 = vmul.f32 %v162, 1.442695
    %v169 = vpow.pop %v168
    %v170 = vmul.f32 %v163, 1.442695
    %v171 = vpow.pop %v170
    %v172 = vadd.f32 %v165, 1.0
    %v173 = vlog2.pop %v172
    %v174 = vmul.f32 %v173, 0.6931472
    %v175 = vmul.f32 -0.5, %v165
    %v176 = vadd.f32 %v175, 1.0
    %v177 = vmul.f32 %v176, %v165
    %v178 = vand.u32 2147483647, %v165
    %vm179 = vcmp.lt.f32.partialorder %v178, 0.0004427343
    %v180 = vsel %vm179, %v177, %v174
    %v181 = vadd.f32 %v167, 1.0
    %v182 = vlog2.pop %v181
    %v183 = vmul.f32 %v182, 0.6931472
    %v184 = vmul.f32 -0.5, %v167
    %v185 = vadd.f32 %v184, 1.0
    %v186 = vmul.f32 %v185, %v167
    %v187 = vand.u32 2147483647, %v167
    %vm188 = vcmp.lt.f32.partialorder %v187, 0.0004427343
    %v189 = vsel %vm188, %v186, %v183
    %v190 = vadd.f32 %v169, 1.0
    %v191 = vlog2.pop %v190
    %v192 = vmul.f32 %v191, 0.6931472
    %v193 = vmul.f32 -0.5, %v169
    %v194 = vadd.f32 %v193, 1.0
    %v195 = vmul.f32 %v194, %v169
    %v196 = vand.u32 2147483647, %v169
    %vm197 = vcmp.lt.f32.partialorder %v196, 0.0004427343
    %v198 = vsel %vm197, %v195, %v192
    %v199 = vadd.f32 %v171, 1.0
    %v200 = vlog2.pop %v199
    %v201 = vmul.f32 %v200, 0.6931472
    %v202 = vmul.f32 -0.5, %v171
    %v203 = vadd.f32 %v202, 1.0
    %v204 = vmul.f32 %v203, %v171
    %v205 = vand.u32 2147483647, %v171
    %vm206 = vcmp.lt.f32.partialorder %v205, 0.0004427343
    %v207 = vsel %vm206, %v204, %v201
    %v208 = vadd.f32 %v144, %v180
    %v209 = vadd.f32 %v145, %v189
    %v210 = vadd.f32 %v146, %v198
    %v211 = vadd.f32 %v147, %v207
    %v212 = vsel %vm148, %v152, %v208
    %v213 = vsel %vm149, %v153, %v209
    %v214 = vsel %vm150, %v154, %v210
    %v215 = vsel %vm151, %v155, %v211
    %v216 = vtanh.pop %v212
    %v217 = vtanh.pop %v213
    %v218 = vtanh.pop %v214
    %v219 = vtanh.pop %v215
    %v220 = vmul.f32 %v130, %v216
    %v221 = vmul.f32 %v133, %v217
    %v222 = vmul.f32 %v138, %v218
    %v223 = vmul.f32 %v141, %v219
    %v224 = vld [vmem:[%s3] sm:$0xff]
    %v225 = vld [vmem:[%s3 + $0x8] sm:$0xff]
    %v226 = vld [vmem:[%s3 + $0x10] sm:$0xff]
    %v227 = vld [vmem:[%s3 + $0x18] sm:$0xff]
    %v228 = vadd.f32 %v220, %v224
    %v229 = vadd.f32 %v221, %v225
    %v230 = vadd.f32 %v222, %v226
    %v231 = vadd.f32 %v223, %v227
    %vm232 = vcmask 261120
    %233 = vst.msk [vmem:[#allocation2] sm:$0xff] %vm232, %v228
    %234 = vst.msk [vmem:[#allocation2 + $0x8] sm:$0xff] %vm232, %v229
    %235 = vst.msk [vmem:[#allocation2 + $0x10] sm:$0xff] %vm232, %v230
    %236 = vst.msk [vmem:[#allocation2 + $0x18] sm:$0xff] %vm232, %v231
    // Predicated region
    $region18: #{tpu_custom_call.1} parent=1 // pred_check
      _
    $region19: #{tpu_custom_call.1} parent=1 // pred_check_branch
      %238 = sbr.rel (0) target = $region21
    $region20: #{tpu_custom_call.1} parent=1 // pred_region
      %s240 = ssub.s32 512, 512
      %241 = vsyncadd [#allocation3], %s240
      %s242 = sshll.u32 [#allocation2], 4
      %s243 = int_to_ptr.vmem [resolvable:$true] %s242
      %248 = dma.vmem_to_hbm [thread:$0]  %s243, 512, %s4, [#allocation3], 128, 128, 8
    $region21: #{tpu_custom_call.1} parent=1 // pred_fallthru
      _
    // Predicated region
    $region22: #{tpu_custom_call.1} parent=1 // pred_check
      _
    $region23: #{tpu_custom_call.1} parent=1 // pred_check_branch
      %250 = sbr.rel (0) target = $region25
    $region24: #{tpu_custom_call.1} parent=1 // pred_region
      %251 = dma.done [#allocation3], 512
    $region25: #{tpu_custom_call.1} parent=1 // pred_fallthru
      _
    %252 = vsyncpa [#allocation3], 1

</llo_original>
